<compile_context>
chip_gen: v5e
topology: v5e:2x2
jax: 0.10.0
libtpu: 0.0.40
codegen_flags: <defaults>
</compile_context>

<pallas_src>
import numpy as np
import jax
import jax.numpy as jnp
from jax.experimental import pallas as pl
from jax.experimental.pallas import tpu as pltpu


def _round_up(n, m):
    return ((n + m - 1) // m) * m


def _make_self_attention_kernel(ci_pad, co_pad, co, has_input_conv):
    qk_end = 2 * ci_pad
    v_end = qk_end + co_pad

    def kernel(x_ref, w_ref, b_ref, gamma_ref, o_ref):
        x = x_ref[0]                                                   # (Cin, HW) bf16

        # Fused 1x1 convolutions (channel-major): proj = W_cat @ x + b_cat.
        proj = jnp.dot(w_ref[...], x,
                       preferred_element_type=jnp.float32) + b_ref[...]   # (Ctot, HW) f32

        q = proj[0:ci_pad].astype(jnp.bfloat16)                        # (ci_pad, HW)
        k = proj[ci_pad:qk_end].astype(jnp.bfloat16)                   # (ci_pad, HW)
        v = proj[qk_end:v_end].astype(jnp.bfloat16)                    # (co_pad, HW)

        # affinity[i, j] = sum_c q[c, i] * k[c, j]   (padded channels are zero)
        a = jax.lax.dot_general(q, k, (((0,), (0,)), ((), ())),
                                preferred_element_type=jnp.float32)    # (HW, HW) f32

        # softmax over j (torch Softmax(dim=-1)), all in f32
        a = a - jnp.max(a, axis=-1, keepdims=True)
        e = jnp.exp(a)
        attn = e * pl.reciprocal(jnp.sum(e, axis=-1, keepdims=True), approx=True)

        # out[c, j] = sum_i v[c, i] * attn[i, j]  -> v @ attn, channel-major, no transpose
        out = jnp.dot(v, attn.astype(jnp.bfloat16),
                      preferred_element_type=jnp.float32)              # (co_pad, HW) f32

        if has_input_conv:
            res = proj[v_end:v_end + co]                               # (Co, HW) f32
        else:
            res = x.astype(jnp.float32)                                # Cin == Co

        o_ref[0] = (gamma_ref[0, 0] * out[:co] + res).astype(o_ref.dtype)

    return kernel


def self_attention_pallas(x_nchw, params):
    B, Cin, H, W = x_nchw.shape
    HW = H * W
    Ci = params["wq"].shape[1]
    Co = params["wv"].shape[1]
    has_input_conv = (Cin != Co)

    ci_pad = _round_up(Ci, 8)
    co_pad = _round_up(Co, 8)

    # Build the fused, transposed, sublane-padded weight / bias blocks.
    def padded(w, b, rows):
        # w: (Cin, Cout), b: (1, Cout) -> (rows, Cin), (rows, 1); extra rows are zero.
        cout = w.shape[1]
        w_p = jnp.zeros((rows, Cin), jnp.float32).at[:cout, :].set(w.T)
        b_p = jnp.zeros((rows, 1), jnp.float32).at[:cout, 0].set(b[0])
        return w_p, b_p

    groups = [("wq", "bq", ci_pad), ("wk", "bk", ci_pad), ("wv", "bv", co_pad)]
    if has_input_conv:
        groups.append(("win", "bin", co_pad))
    w_list, b_list = [], []
    for wn, bn, rows in groups:
        w_p, b_p = padded(params[wn], params[bn], rows)
        w_list.append(w_p)
        b_list.append(b_p)
    w_cat = jnp.concatenate(w_list, axis=0).astype(jnp.bfloat16)       # (Ctot, Cin)
    b_cat = jnp.concatenate(b_list, axis=0)                            # (Ctot, 1) f32
    gamma = params["gamma"].reshape(1, 1).astype(jnp.float32)

    # NCHW -> channel-major (B, Cin, HW): a pure reshape, no transpose. bf16 halves HBM bytes.
    x_cm = x_nchw.reshape(B, Cin, HW).astype(jnp.bfloat16)

    kernel = _make_self_attention_kernel(ci_pad, co_pad, Co, has_input_conv)

    out = pl.pallas_call(
        kernel,
        out_shape=jax.ShapeDtypeStruct((B, Co, HW), jnp.float32),
        grid=(B,),
        in_specs=[
            pl.BlockSpec((1, Cin, HW), lambda b: (b, 0, 0)),
            pl.BlockSpec(w_cat.shape, lambda b: (0, 0)),
            pl.BlockSpec(b_cat.shape, lambda b: (0, 0)),
            pl.BlockSpec(memory_space=pltpu.MemorySpace.SMEM),          # gamma scalar
        ],
        out_specs=pl.BlockSpec((1, Co, HW), lambda b: (b, 0, 0)),
        compiler_params=pltpu.CompilerParams(
            dimension_semantics=("parallel",),
            vmem_limit_bytes=64 * 1024 * 1024,
        ),
    )(x_cm, w_cat, b_cat, gamma)

    # (B, Co, HW) -> NCHW: again a pure reshape.
    return out.reshape(B, Co, H, W)


def self_attention_reference(x_nchw, params):
    """Pure-JAX (f32) reference mirroring the PyTorch forward."""
    B, Cin, H, W = x_nchw.shape
    HW = H * W
    Co = params["wv"].shape[1]
    x = x_nchw.reshape(B, Cin, HW).astype(jnp.float32)                 # (B, Cin, HW)

    def conv1x1(w, b):  # w: (Cin, Cout), b: (1, Cout)
        return jnp.einsum("co,bch->boh", w, x) + b[0][None, :, None]

    q = conv1x1(params["wq"], params["bq"])                            # (B, Ci, HW)
    k = conv1x1(params["wk"], params["bk"])                            # (B, Ci, HW)
    v = conv1x1(params["wv"], params["bv"])                            # (B, Co, HW)
    a = jnp.einsum("bci,bcj->bij", q, k)                               # affinity
    attn = jax.nn.softmax(a, axis=-1)
    out = jnp.einsum("bci,bij->bcj", v, attn)                          # (B, Co, HW)
    res = conv1x1(params["win"], params["bin"]) if Cin != Co else x
    y = params["gamma"][0, 0] * out + res
    return y.reshape(B, Co, H, W)


def init_params(key, inplane, outplane, channel_stride=8):
    inter = inplane // channel_stride
    ks = jax.random.split(key, 8)
    scale = 0.1
    params = {
        # conv weights stored as (Cin, Cout) matrices (torch conv1x1 weight.T)
        "wq": scale * jax.random.normal(ks[0], (inplane, inter), jnp.float32),
        "bq": scale * jax.random.normal(ks[1], (1, inter), jnp.float32),
        "wk": scale * jax.random.normal(ks[2], (inplane, inter), jnp.float32),
        "bk": scale * jax.random.normal(ks[3], (1, inter), jnp.float32),
        "wv": scale * jax.random.normal(ks[4], (inplane, outplane), jnp.float32),
        "bv": scale * jax.random.normal(ks[5], (1, outplane), jnp.float32),
        # input_conv (only used when inplane != outplane)
        "win": scale * jax.random.normal(ks[6], (inplane, outplane), jnp.float32),
        "bin": scale * jax.random.normal(ks[7], (1, outplane), jnp.float32),
        # torch init is gamma=0; use 0.5 here so the attention branch is exercised.
        "gamma": jnp.full((1, 1), 0.5, jnp.float32),
    }
    return params


if __name__ == "__main__":
    key = jax.random.PRNGKey(0)

    configs = [
        dict(B=2, inplane=32, outplane=16, H=16, W=16, channel_stride=8),  # exercises input_conv
        dict(B=2, inplane=32, outplane=32, H=16, W=16, channel_stride=8),  # identity residual
    ]
    for cfg in configs:
        kx, kp, key = jax.random.split(key, 3)
        x = jax.random.normal(kx, (cfg["B"], cfg["inplane"], cfg["H"], cfg["W"]), jnp.float32)
        # Quantize input to bf16 once so the kernel and reference see identical values;
        # remaining difference is bf16 MXU operands (f32 accumulation) in the kernel.
        x = x.astype(jnp.bfloat16).astype(jnp.float32)
        params = init_params(kp, cfg["inplane"], cfg["outplane"], cfg["channel_stride"])

        y = jax.block_until_ready(self_attention_pallas(x, params))
        y_ref = self_attention_reference(x, params)
        np.testing.assert_allclose(np.asarray(y), np.asarray(y_ref), rtol=3e-2, atol=3e-2)

    print("KERNEL_OK")
</pallas_src>

<mosaic_0001>
module attributes {stable_mosaic.version = 11 : i64} {
  func.func @kernel(%arg0: i32, %arg1: memref<1x32x256xbf16, #tpu.memory_space<vmem>>, %arg2: memref<48x32xbf16, #tpu.memory_space<vmem>>, %arg3: memref<48x1xf32, #tpu.memory_space<vmem>>, %arg4: memref<1x1xf32, #tpu.memory_space<smem>>, %arg5: memref<1x16x256xf32, #tpu.memory_space<vmem>>) attributes {dimension_semantics = [#tpu.dimension_semantics<parallel>], iteration_bounds = array<i64: 2>, scalar_prefetch = 0 : i64, scratch_operands = 0 : i64, tpu.core_type = #tpu.core_type<tc>, window_params = [{transform_indices = @transform_0, window_bounds = array<i64: 1, 32, 256>}, {pipeline_mode = #tpu.pipeline_mode<synchronous>, transform_indices = @transform_1, window_bounds = array<i64: 48, 32>}, {pipeline_mode = #tpu.pipeline_mode<synchronous>, transform_indices = @transform_2, window_bounds = array<i64: 48, 1>}, {transform_indices = @transform_3, window_bounds = array<i64: 1, 1>}, {transform_indices = @transform_4, window_bounds = array<i64: 1, 16, 256>}]} {
    %c0 = arith.constant 0 : index
    %c0_0 = arith.constant 0 : index
    %c0_1 = arith.constant 0 : index
    %0 = vector.load %arg1[%c0, %c0_0, %c0_1] : memref<1x32x256xbf16, #tpu.memory_space<vmem>>, vector<1x32x256xbf16>
    %1 = vector.shape_cast %0 : vector<1x32x256xbf16> to vector<32x256xbf16>
    %c0_2 = arith.constant 0 : index
    %c0_3 = arith.constant 0 : index
    %2 = vector.load %arg2[%c0_2, %c0_3] : memref<48x32xbf16, #tpu.memory_space<vmem>>, vector<48x32xbf16>
    %cst = arith.constant dense<0.000000e+00> : vector<48x256xf32>
    %3 = tpu.matmul %2, %1, %cst {dimension_numbers = #tpu.dot_dimension_numbers<[1], [0], [0], [1], [0, 0, 1, 1], [], []>} : vector<48x32xbf16>, vector<32x256xbf16>, vector<48x256xf32> -> vector<48x256xf32>
    %c0_4 = arith.constant 0 : index
    %c0_5 = arith.constant 0 : index
    %4 = vector.load %arg3[%c0_4, %c0_5] : memref<48x1xf32, #tpu.memory_space<vmem>>, vector<48x1xf32>
    %5 = vector.broadcast %4 : vector<48x1xf32> to vector<48x256xf32>
    %6 = arith.addf %3, %5 : vector<48x256xf32>
    %7 = vector.extract_strided_slice %6 {offsets = [0, 0], sizes = [8, 256], strides = [1, 1]} : vector<48x256xf32> to vector<8x256xf32>
    %8 = arith.truncf %7 : vector<8x256xf32> to vector<8x256xbf16>
    %9 = vector.extract_strided_slice %6 {offsets = [8, 0], sizes = [8, 256], strides = [1, 1]} : vector<48x256xf32> to vector<8x256xf32>
    %10 = arith.truncf %9 : vector<8x256xf32> to vector<8x256xbf16>
    %11 = vector.extract_strided_slice %6 {offsets = [16, 0], sizes = [16, 256], strides = [1, 1]} : vector<48x256xf32> to vector<16x256xf32>
    %12 = arith.truncf %11 : vector<16x256xf32> to vector<16x256xbf16>
    %cst_6 = arith.constant dense<0.000000e+00> : vector<256x256xf32>
    %13 = tpu.matmul %8, %10, %cst_6 {dimension_numbers = #tpu.dot_dimension_numbers<[0], [0], [1], [1], [0, 1, 1, 1], [], []>} : vector<8x256xbf16>, vector<8x256xbf16>, vector<256x256xf32> -> vector<256x256xf32>
    %cst_7 = arith.constant dense<0xFF800000> : vector<256xf32>
    %14 = vector.multi_reduction <maximumf>, %13, %cst_7 [1] : vector<256x256xf32> to vector<256xf32>
    %15 = vector.shape_cast %14 : vector<256xf32> to vector<256x1xf32>
    %16 = vector.broadcast %15 : vector<256x1xf32> to vector<256x256xf32>
    %17 = arith.subf %13, %16 : vector<256x256xf32>
    %18 = math.exp %17 : vector<256x256xf32>
    %cst_8 = arith.constant dense<0.000000e+00> : vector<256xf32>
    %19 = vector.multi_reduction <add>, %18, %cst_8 [1] : vector<256x256xf32> to vector<256xf32>
    %20 = vector.shape_cast %19 : vector<256xf32> to vector<256x1xf32>
    %21 = tpu.reciprocal %20 {approx = true} : vector<256x1xf32> -> vector<256x1xf32>
    %22 = vector.broadcast %21 : vector<256x1xf32> to vector<256x256xf32>
    %23 = arith.mulf %18, %22 : vector<256x256xf32>
    %24 = arith.truncf %23 : vector<256x256xf32> to vector<256x256xbf16>
    %cst_9 = arith.constant dense<0.000000e+00> : vector<16x256xf32>
    %25 = tpu.matmul %12, %24, %cst_9 {dimension_numbers = #tpu.dot_dimension_numbers<[1], [0], [0], [1], [0, 0, 1, 1], [], []>} : vector<16x256xbf16>, vector<256x256xbf16>, vector<16x256xf32> -> vector<16x256xf32>
    %26 = vector.extract_strided_slice %6 {offsets = [32, 0], sizes = [16, 256], strides = [1, 1]} : vector<48x256xf32> to vector<16x256xf32>
    %c0_10 = arith.constant 0 : index
    %c0_11 = arith.constant 0 : index
    %27 = memref.load %arg4[%c0_10, %c0_11] : memref<1x1xf32, #tpu.memory_space<smem>>
    %28 = vector.broadcast %27 : f32 to vector<16x256xf32>
    %29 = arith.mulf %28, %25 : vector<16x256xf32>
    %30 = arith.addf %29, %26 : vector<16x256xf32>
    %c0_12 = arith.constant 0 : index
    %c0_13 = arith.constant 0 : index
    %c0_14 = arith.constant 0 : index
    %31 = vector.load %arg5[%c0_12, %c0_13, %c0_14] : memref<1x16x256xf32, #tpu.memory_space<vmem>>, vector<1x16x256xf32>
    %32 = vector.shape_cast %31 : vector<1x16x256xf32> to vector<16x256xf32>
    %33 = vector.shape_cast %30 : vector<16x256xf32> to vector<1x16x256xf32>
    tpu.vector_store %arg5[%c0_12, %c0_13, %c0_14], %33 {strides = array<i32>} : memref<1x16x256xf32, #tpu.memory_space<vmem>>, vector<1x16x256xf32>,
    return
  }
  func.func @transform_0(%arg0: i32) -> (i32, i32, i32) {
    %c0_i32 = arith.constant 0 : i32
    %c0_i32_0 = arith.constant 0 : i32
    %c0_i32_1 = arith.constant 0 : i32
    return %arg0, %c0_i32, %c0_i32_0 : i32, i32, i32
  }
  func.func @transform_1(%arg0: i32) -> (i32, i32) {
    %c0_i32 = arith.constant 0 : i32
    %c0_i32_0 = arith.constant 0 : i32
    %c0_i32_1 = arith.constant 0 : i32
    return %c0_i32, %c0_i32_0 : i32, i32
  }
  func.func @transform_2(%arg0: i32) -> (i32, i32) {
    %c0_i32 = arith.constant 0 : i32
    %c0_i32_0 = arith.constant 0 : i32
    %c0_i32_1 = arith.constant 0 : i32
    return %c0_i32, %c0_i32_0 : i32, i32
  }
  func.func @transform_3(%arg0: i32) -> (i32, i32) {
    %c0_i32 = arith.constant 0 : i32
    %c0_i32_0 = arith.constant 0 : i32
    %c0_i32_1 = arith.constant 0 : i32
    return %c0_i32, %c0_i32_0 : i32, i32
  }
  func.func @transform_4(%arg0: i32) -> (i32, i32, i32) {
    %c0_i32 = arith.constant 0 : i32
    %c0_i32_0 = arith.constant 0 : i32
    %c0_i32_1 = arith.constant 0 : i32
    return %arg0, %c0_i32, %c0_i32_0 : i32, i32, i32
  }
}

</mosaic_0001>

<llo_original>
// kernel: tpu_custom_call.1
$region0: #{tpu_custom_call.1}
  #allocation0 [shape = 'u32[]', space=smem, size = 0x4, offset = 0x4, fixed_abs, tag = 'smem constant byte address 0x4 - core index']
  #allocation1 [shape = 'u32[72,128]{1,0:T(1,128)}', space=vmem, size = 0x9000, scoped, tag = 'internal scratch']
  #allocation2 [shape = 'f32[1,1]{1,0:T(1,128)S(6)}', space=smem, size = 0x200, scoped, tag = 'scoped memory for tpu_custom_call.1']
  %s0 = inlined_call_operand.vmem [shape: bf16[2,32,256], index: 0, kind: input, shape index: {}]
  %s1 = inlined_call_operand.vmem [shape: bf16[48,32], index: 1, kind: input, shape index: {}]
  %s2 = inlined_call_operand.vmem [shape: f32[48,1], index: 2, kind: input, shape index: {}]
  %s3 = inlined_call_operand.<no memory space> [shape: f32[1,1], index: 3, kind: input, shape index: {}]
  %s4 = inlined_call_operand.hbm [shape: f32[2,16,256], index: 4, kind: output, shape index: {}]
  %s5 = sld [smem:[#allocation0]]
  $region49: #{tpu_custom_call.1} parent=0
    _
  %s7 = ssub.s32 1, %s5
  %s8 = scalar_select 0, %s7, %s5
  %9 = sst [smem:[#allocation2]] %s3
  $region1: #{tpu_custom_call.1} parent=0
    #allocation3 [shape = 'u8[32768]{0}', space=vmem, size = 0x8000, scoped, tag = 'output window, operand 0']
    #allocation4 [shape = 's32[2]{0}', space=sflag, size = 0x8, scoped, tag = 'scoped memory for tpu_custom_call.1']
    %10 = vsyncpa [#allocation4], 0
    %s11 = scalar_lea.sflag [#allocation4], 1
    %12 = vsyncpa %s11, 0
    loop: start=0, step=1, limit=4
    $region2: #{tpu_custom_call.1} parent=1 // loop_pre_header
      _
    $region3: #{tpu_custom_call.1} parent=1 // loop_header
      %s14 = sphi 0, %s18
      %p15 = scmp.ge.s32.totalorder %s14, 4
      %s24 = sphi 0, %s26
      %s27 = sphi 0, %s24
      %s28 = sphi 0, %s27
      %s44 = sphi 0, %s28
      %s48 = sphi 0, %s48
      %s50 = sphi 0, %s48
      %s51 = sphi 0, %s50
      %s65 = sphi 0, %s51
      %s69 = sphi 0, %s69
      %s71 = sphi 0, %s69
      %s72 = sphi 0, %s71
      %s86 = sphi 0, %s72
      %s90 = sphi 0, %s90
      %s92 = sphi 0, %s90
      %s93 = sphi 0, %s92
      %s107 = sphi 0, %s93
      %s113 = sphi 0, %s115
      %s116 = sphi 0, %s113
      %s117 = sphi 0, %s116
      %s133 = sphi 0, %s117
    $region4: #{tpu_custom_call.1} parent=1 // loop_header_branch
      %17 = sbr.rel (%p15) target = $region8
    $region5: #{tpu_custom_call.1} parent=1 // loop_body
      %s19 = ssub.s32 %s14, 1
      %s20 = ssub.s32 %s14, 2
      %s21 = sadd.s32 %s14, 1
      %s22 = ssub.s32 %s14, %s21
      %p23 = scmp.eq.s32.totalorder %s22, 0
      %s25 = sadd.s32 %s24, 1
      %s26 = scalar_select %p23, %s24, %s25
      %p29 = pneg %p23
      %p30 = scmp.eq.s32.totalorder %s14, 1
      %p31 = por %p29, %p30
      %p32 = scmp.ne.s32.totalorder %s24, %s27
      %p33 = scmp.eq.s32.totalorder %s14, 0
      %p34 = por %p32, %p33
      %p35 = scmp.ne.s32.totalorder %s24, %s27
      %p36 = scmp.eq.s32.totalorder %s19, 1
      %p37 = por %p35, %p36
      %p38 = scmp.ne.s32.totalorder %s27, %s28
      %p39 = scmp.eq.s32.totalorder %s19, 0
      %p40 = por %p38, %p39
      %p41 = scmp.ne.s32.totalorder %s27, %s28
      %p42 = scmp.eq.s32.totalorder %s20, 1
      %p43 = por %p41, %p42
      %p45 = scmp.ne.s32.totalorder %s28, %s44
      %p46 = scmp.eq.s32.totalorder %s20, 0
      %p47 = por %p45, %p46
      %s49 = sadd.s32 %s48, 1
      %p52 = scmp.eq.s32.totalorder %s14, 1
      %p53 = scmp.ne.s32.totalorder %s48, %s50
      %p54 = scmp.eq.s32.totalorder %s14, 0
      %p55 = por %p53, %p54
      %p56 = scmp.ne.s32.totalorder %s48, %s50
      %p57 = scmp.eq.s32.totalorder %s19, 1
      %p58 = por %p56, %p57
      %p59 = scmp.ne.s32.totalorder %s50, %s51
      %p60 = scmp.eq.s32.totalorder %s19, 0
      %p61 = por %p59, %p60
      %p62 = scmp.ne.s32.totalorder %s50, %s51
      %p63 = scmp.eq.s32.totalorder %s20, 1
      %p64 = por %p62, %p63
      %p66 = scmp.ne.s32.totalorder %s51, %s65
      %p67 = scmp.eq.s32.totalorder %s20, 0
      %p68 = por %p66, %p67
      %s70 = sadd.s32 %s69, 1
      %p73 = scmp.eq.s32.totalorder %s14, 1
      %p74 = scmp.ne.s32.totalorder %s69, %s71
      %p75 = scmp.eq.s32.totalorder %s14, 0
      %p76 = por %p74, %p75
      %p77 = scmp.ne.s32.totalorder %s69, %s71
      %p78 = scmp.eq.s32.totalorder %s19, 1
      %p79 = por %p77, %p78
      %p80 = scmp.ne.s32.totalorder %s71, %s72
      %p81 = scmp.eq.s32.totalorder %s19, 0
      %p82 = por %p80, %p81
      %p83 = scmp.ne.s32.totalorder %s71, %s72
      %p84 = scmp.eq.s32.totalorder %s20, 1
      %p85 = por %p83, %p84
      %p87 = scmp.ne.s32.totalorder %s72, %s86
      %p88 = scmp.eq.s32.totalorder %s20, 0
      %p89 = por %p87, %p88
      %s91 = sadd.s32 %s90, 1
      %p94 = scmp.eq.s32.totalorder %s14, 1
      %p95 = scmp.ne.s32.totalorder %s90, %s92
      %p96 = scmp.eq.s32.totalorder %s14, 0
      %p97 = por %p95, %p96
      %p98 = scmp.ne.s32.totalorder %s90, %s92
      %p99 = scmp.eq.s32.totalorder %s19, 1
      %p100 = por %p98, %p99
      %p101 = scmp.ne.s32.totalorder %s92, %s93
      %p102 = scmp.eq.s32.totalorder %s19, 0
      %p103 = por %p101, %p102
      %p104 = scmp.ne.s32.totalorder %s92, %s93
      %p105 = scmp.eq.s32.totalorder %s20, 1
      %p106 = por %p104, %p105
      %p108 = scmp.ne.s32.totalorder %s93, %s107
      %p109 = scmp.eq.s32.totalorder %s20, 0
      %p110 = por %p108, %p109
      %s111 = ssub.s32 %s14, %s21
      %p112 = scmp.eq.s32.totalorder %s111, 0
      %s114 = sadd.s32 %s113, 1
      %s115 = scalar_select %p112, %s113, %s114
      %p118 = pneg %p112
      %p119 = scmp.eq.s32.totalorder %s14, 1
      %p120 = por %p118, %p119
      %p121 = scmp.ne.s32.totalorder %s113, %s116
      %p122 = scmp.eq.s32.totalorder %s14, 0
      %p123 = por %p121, %p122
      %p124 = scmp.ne.s32.totalorder %s113, %s116
      %p125 = scmp.eq.s32.totalorder %s19, 1
      %p126 = por %p124, %p125
      %p127 = scmp.ne.s32.totalorder %s116, %s117
      %p128 = scmp.eq.s32.totalorder %s19, 0
      %p129 = por %p127, %p128
      %p130 = scmp.ne.s32.totalorder %s116, %s117
      %p131 = scmp.eq.s32.totalorder %s20, 1
      %p132 = por %p130, %p131
      %p134 = scmp.ne.s32.totalorder %s117, %s133
      %p135 = scmp.eq.s32.totalorder %s20, 0
      %p136 = por %p134, %p135
      %p137 = scmp.le.s32.totalorder 1, %s14
      %p138 = scmp.lt.s32.totalorder %s14, 3
      %p139 = pnand %p137, %p138
      %p140 = pneg %p139
      // Predicated region
      $region9: #{tpu_custom_call.1} parent=5 // pred_check
        _
      $region10: #{tpu_custom_call.1} parent=5 // pred_check_branch
        %142 = sbr.rel (%p139) target = $region12
      $region11: #{tpu_custom_call.1} parent=5 // pred_region
        %s143 = ssub.s32 %s14, 1
        // Predicated region
        $region13: #{tpu_custom_call.1} parent=11 // pred_check
          %p144 = pneg %p61
        $region14: #{tpu_custom_call.1} parent=11 // pred_check_branch
          %146 = sbr.rel (%p144) target = $region16
        $region15: #{tpu_custom_call.1} parent=11 // pred_region
          _
        $region16: #{tpu_custom_call.1} parent=11 // pred_fallthru
          _
        // Predicated region
        $region17: #{tpu_custom_call.1} parent=11 // pred_check
          %p147 = pneg %p82
        $region18: #{tpu_custom_call.1} parent=11 // pred_check_branch
          %149 = sbr.rel (%p147) target = $region20
        $region19: #{tpu_custom_call.1} parent=11 // pred_region
          _
        $region20: #{tpu_custom_call.1} parent=11 // pred_fallthru
          _
        // Predicated region
        $region21: #{tpu_custom_call.1} parent=11 // pred_check
          %p150 = pneg %p103
        $region22: #{tpu_custom_call.1} parent=11 // pred_check_branch
          %152 = sbr.rel (%p150) target = $region24
        $region23: #{tpu_custom_call.1} parent=11 // pred_region
          _
        $region24: #{tpu_custom_call.1} parent=11 // pred_fallthru
          _
      $region12: #{tpu_custom_call.1} parent=5 // pred_fallthru
        _
      %p153 = scmp.lt.s32.totalorder %s14, 2
      // Predicated region
      $region25: #{tpu_custom_call.1} parent=5 // pred_check
        %p154 = pneg %p153
      $region26: #{tpu_custom_call.1} parent=5 // pred_check_branch
        %156 = sbr.rel (%p154) target = $region28
      $region27: #{tpu_custom_call.1} parent=5 // pred_region
        // Predicated region
        $region29: #{tpu_custom_call.1} parent=27 // pred_check
          %p157 = pneg %p34
        $region30: #{tpu_custom_call.1} parent=27 // pred_check_branch
          %159 = sbr.rel (%p157) target = $region32
        $region31: #{tpu_custom_call.1} parent=27 // pred_region
          %p160 = scmp.lt.s32.totalorder %s14, 1
          %s161 = scalar_select %p160, %s14, 1
          %s162 = smul.addr %s161, 8
          %s163 = smul.addr %s162, 4
          %s164 = scalar_lea.vmem %s0, %s163
        $region32: #{tpu_custom_call.1} parent=27 // pred_fallthru
          _
      $region28: #{tpu_custom_call.1} parent=5 // pred_fallthru
        _
      %p165 = scmp.le.s32.totalorder 1, %s14
      %p166 = scmp.lt.s32.totalorder %s14, 3
      %p167 = pnand %p165, %p166
      %p168 = pneg %p167
      // Predicated region
      $region33: #{tpu_custom_call.1} parent=5 // pred_check
        _
      $region34: #{tpu_custom_call.1} parent=5 // pred_check_branch
        %170 = sbr.rel (%p167) target = $region36
      $region35: #{tpu_custom_call.1} parent=5 // pred_region
        %s171 = ssub.s32 %s14, 1
        %p172 = scmp.lt.s32.totalorder %s19, 1
        %s173 = scalar_select %p172, %s19, 1
        %s174 = smul.addr %s173, 8
        %s175 = smul.addr %s174, 4
        %s176 = scalar_lea.vmem %s0, %s175
        %p177 = pneg %p40
        %p178 = pneg %p37
        %p179 = pneg %p61
        %p180 = pneg %p58
        %p181 = pneg %p82
        %p182 = pneg %p79
        %p183 = pneg %p103
        %p184 = pneg %p100
        %p185 = pneg %p129
        %p186 = pneg %p126
        %s187 = sand.u32 %s116, 1
        %s188 = scalar_lea.sflag [#allocation4], %s187
        %s189 = sand.u32 %s116, 1
        %s190 = smul.addr %s189, 32
        %s191 = scalar_lea.vmem [#allocation3], %s190
        %p192 = scmp.lt.s32.totalorder %s19, 1
        %s193 = scalar_select %p192, %s19, 1
        %s194 = smul.addr %s193, 8
        %s195 = smul.addr %s194, 4
        %s196 = scalar_lea.vmem %s0, %s195
        %v198 = vld [vmem:[%s196] sm:$0xff]
        %v199 = vld [vmem:[%s196 + $0x8] sm:$0xff]
        %v200 = vld [vmem:[%s196 + $0x10] sm:$0xff]
        %v201 = vld [vmem:[%s196 + $0x18] sm:$0xff]
        %v202 = vld [vmem:[%s1] sm:$0xf]
        %v203 = vld [vmem:[%s1 + $0x4] sm:$0xf]
        %v204 = vld [vmem:[%s1 + $0x8] sm:$0xf]
        %v205 = vld [vmem:[%s1 + $0xc] sm:$0xf]
        %v206 = vld [vmem:[%s1 + $0x10] sm:$0xf]
        %v207 = vld [vmem:[%s1 + $0x14] sm:$0xf]
        %v208 = vld [vmem:[%s2] sm:$0xff]
        %v209 = vld [vmem:[%s2 + $0x8] sm:$0xff]
        %v210 = vld [vmem:[%s2 + $0x10] sm:$0xff]
        %v211 = vld [vmem:[%s2 + $0x18] sm:$0xff]
        %v212 = vld [vmem:[%s2 + $0x20] sm:$0xff]
        %v213 = vld [vmem:[%s2 + $0x28] sm:$0xff]
        %215 = vset.pattern.permute.xlu0 0
        %216 = vperm.xlu0 %215, %v208
        %v217 = vpop.permute.xlu0 %216
        %220 = vset.pattern.permute.xlu0 0
        %221 = vperm.xlu0 %220, %v209
        %v222 = vpop.permute.xlu0 %221
        %225 = vset.pattern.permute.xlu0 0
        %226 = vperm.xlu0 %225, %v210
        %v227 = vpop.permute.xlu0 %226
        %230 = vset.pattern.permute.xlu0 0
        %231 = vperm.xlu0 %230, %v211
        %v232 = vpop.permute.xlu0 %231
        %235 = vset.pattern.permute.xlu0 0
        %236 = vperm.xlu0 %235, %v212
        %v237 = vpop.permute.xlu0 %236
        %240 = vset.pattern.permute.xlu0 0
        %241 = vperm.xlu0 %240, %v213
        %v242 = vpop.permute.xlu0 %241
        %v250 = vunpack.c.l.b16 %v202
        %v251 = vunpack.c.l.b16 %v203
        %v252 = vunpack.c.l.b16 %v204
        %v253 = vunpack.c.l.b16 %v205
        %v254 = vunpack.c.l.b16 %v206
        %v255 = vunpack.c.l.b16 %v207
        %v256 = vpack.c.b16 %v251, %v250
        %v257 = vpack.c.b16 %v253, %v252
        %v258 = vpack.c.b16 %v255, %v254
        %v263 = vunpack.c.l.b16 %v198
        %v264 = vunpack.c.h.b16 %v198
        %v265 = vunpack.c.l.b16 %v199
        %v266 = vunpack.c.h.b16 %v199
        %v267 = vunpack.c.l.b16 %v200
        %v268 = vunpack.c.h.b16 %v200
        %v269 = vunpack.c.l.b16 %v201
        %v270 = vunpack.c.h.b16 %v201
        %v271 = vpack.c.b16 %v265, %v263
        %v272 = vpack.c.b16 %v266, %v264
        %v273 = vpack.c.b16 %v269, %v267
        %v274 = vpack.c.b16 %v270, %v268
        %vm279 = vcmask 261120
        %v281 = vsel %vm279, %v256, 0
        %v284 = vsel %vm279, %v257, 0
        %v287 = vsel %vm279, %v258, 0
        %289 = vmatpush.bf16.msra.mxu0 0
        %290 = vmatpush.bf16.msra.mxu0 0
        %291 = vmatpush.bf16.msra.mxu0 0
        %292 = vmatpush.bf16.msra.mxu0 0
        %293 = vmatpush.bf16.msra.mxu0 0
        %294 = vmatpush.bf16.msra.mxu0 0
        %295 = vmatpush.bf16.msra.mxu0 %v273
        %296 = vmatpush.bf16.msra.mxu0 %v271
        %297 = vmatmul.bf16.gmra.mxu0 %v281
        %v298 = vpop.f32.mrf.mxu0
        %v299 = vadd.f32 %v217, %v298
        %v300 = vpop.f32.mrf.mxu0
        %v301 = vadd.f32 %v222, %v300
        %302 = vmatmul.bf16.gmra.mxu0 %v284
        %v303 = vpop.f32.mrf.mxu0
        %v304 = vadd.f32 %v227, %v303
        %v305 = vpop.f32.mrf.mxu0
        %v306 = vadd.f32 %v232, %v305
        %307 = vmatmul.bf16.gmra.mxu0 %v287
        %v308 = vpop.f32.mrf.mxu0
        %v309 = vadd.f32 %v237, %v308
        %v310 = vpop.f32.mrf.mxu0
        %v311 = vadd.f32 %v242, %v310
        %312 = vdwg.mxu0
        %313 = vmatpush.bf16.msra.mxu0 0
        %314 = vmatpush.bf16.msra.mxu0 0
        %315 = vmatpush.bf16.msra.mxu0 0
        %316 = vmatpush.bf16.msra.mxu0 0
        %317 = vmatpush.bf16.msra.mxu0 0
        %318 = vmatpush.bf16.msra.mxu0 0
        %319 = vmatpush.bf16.msra.mxu0 %v274
        %320 = vmatpush.bf16.msra.mxu0 %v272
        %321 = vmatmul.bf16.gmra.mxu0 %v281
        %v322 = vpop.f32.mrf.mxu0
        %v323 = vadd.f32 %v217, %v322
        %v324 = vpop.f32.mrf.mxu0
        %v325 = vadd.f32 %v222, %v324
        %326 = vmatmul.bf16.gmra.mxu0 %v284
        %v327 = vpop.f32.mrf.mxu0
        %v328 = vadd.f32 %v227, %v327
        %v329 = vpop.f32.mrf.mxu0
        %v330 = vadd.f32 %v232, %v329
        %331 = vmatmul.bf16.gmra.mxu0 %v287
        %v332 = vpop.f32.mrf.mxu0
        %v333 = vadd.f32 %v237, %v332
        %v334 = vpop.f32.mrf.mxu0
        %v335 = vadd.f32 %v242, %v334
        %336 = vdwg.mxu0
        %v337 = vpack.c.bf16 %v299, %v299
        %v338 = vpack.c.bf16 %v323, %v323
        %v339 = vpack.c.bf16 %v301, %v301
        %v340 = vpack.c.bf16 %v325, %v325
        %v341 = vpack.c.bf16 %v306, %v304
        %v342 = vpack.c.bf16 %v330, %v328
        %343 = vxpose.binary.xlu0.c.b16.start [1/16] %v338, %v337, 128
        %344 = vxpose.binary.xlu0.c.b16.cont [2/16] 0, 0, 128
        %345 = vxpose.binary.xlu0.c.b16.cont [3/16] 0, 0, 128
        %346 = vxpose.binary.xlu0.c.b16.cont [4/16] 0, 0, 128
        %347 = vxpose.binary.xlu0.c.b16.cont [5/16] 0, 0, 128
        %348 = vxpose.binary.xlu0.c.b16.cont [6/16] 0, 0, 128
        %349 = vxpose.binary.xlu0.c.b16.cont [7/16] 0, 0, 128
        %350 = vxpose.binary.xlu0.c.b16.end [8/16] 0, 0, 128
        %v351 = vpop.trf.xlu0
        %v352 = vpop.trf.xlu0
        %v353 = vpop.trf.xlu0
        %v354 = vpop.trf.xlu0
        %v355 = vpop.trf.xlu0
        %v356 = vpop.trf.xlu0
        %v357 = vpop.trf.xlu0
        %v358 = vpop.trf.xlu0
        %v359 = vpop.trf.xlu0
        %v360 = vpop.trf.xlu0
        %v361 = vpop.trf.xlu0
        %v362 = vpop.trf.xlu0
        %v363 = vpop.trf.xlu0
        %v364 = vpop.trf.xlu0
        %v365 = vpop.trf.xlu0
        %v366 = vpop.trf.xlu0
        %vm367 = vcmask 64512
        %v369 = vsel %vm367, %v351, 0
        %v372 = vsel %vm367, %v353, 0
        %v375 = vsel %vm367, %v355, 0
        %v378 = vsel %vm367, %v357, 0
        %v381 = vsel %vm367, %v359, 0
        %v384 = vsel %vm367, %v361, 0
        %v387 = vsel %vm367, %v363, 0
        %v390 = vsel %vm367, %v365, 0
        %v393 = vsel %vm367, %v352, 0
        %v396 = vsel %vm367, %v354, 0
        %v399 = vsel %vm367, %v356, 0
        %v402 = vsel %vm367, %v358, 0
        %v405 = vsel %vm367, %v360, 0
        %v408 = vsel %vm367, %v362, 0
        %v411 = vsel %vm367, %v364, 0
        %v414 = vsel %vm367, %v366, 0
        %vm416 = vcmask 1043456
        %v418 = vsel %vm416, %v339, 0
        %v421 = vsel %vm416, %v340, 0
        %423 = vmatpush.bf16.msra.mxu0 0
        %424 = vmatpush.bf16.msra.mxu0 0
        %425 = vmatpush.bf16.msra.mxu0 0
        %426 = vmatpush.bf16.msra.mxu0 0
        %427 = vmatpush.bf16.msra.mxu0 0
        %428 = vmatpush.bf16.msra.mxu0 0
        %429 = vmatpush.bf16.msra.mxu0 0
        %430 = vmatpush.bf16.msra.mxu0 %v418
        %431 = vmatmul.bf16.gmra.mxu0 %v369
        %v432 = vpop.f32.mrf.mxu0
        %v433 = vadd.f32 0.0, %v432
        %v434 = vpop.f32.mrf.mxu0
        %v435 = vadd.f32 0.0, %v434
        %436 = vmatmul.bf16.gmra.mxu0 %v372
        %v437 = vpop.f32.mrf.mxu0
        %v438 = vadd.f32 0.0, %v437
        %v439 = vpop.f32.mrf.mxu0
        %v440 = vadd.f32 0.0, %v439
        %441 = vmatmul.bf16.gmra.mxu0 %v375
        %v442 = vpop.f32.mrf.mxu0
        %v443 = vadd.f32 0.0, %v442
        %v444 = vpop.f32.mrf.mxu0
        %v445 = vadd.f32 0.0, %v444
        %446 = vmatmul.bf16.gmra.mxu0 %v378
        %v447 = vpop.f32.mrf.mxu0
        %v448 = vadd.f32 0.0, %v447
        %v449 = vpop.f32.mrf.mxu0
        %v450 = vadd.f32 0.0, %v449
        %451 = vmatmul.bf16.gmra.mxu0 %v381
        %v452 = vpop.f32.mrf.mxu0
        %v453 = vadd.f32 0.0, %v452
        %v454 = vpop.f32.mrf.mxu0
        %v455 = vadd.f32 0.0, %v454
        %456 = vmatmul.bf16.gmra.mxu0 %v384
        %v457 = vpop.f32.mrf.mxu0
        %v458 = vadd.f32 0.0, %v457
        %v459 = vpop.f32.mrf.mxu0
        %v460 = vadd.f32 0.0, %v459
        %461 = vmatmul.bf16.gmra.mxu0 %v387
        %v462 = vpop.f32.mrf.mxu0
        %v463 = vadd.f32 0.0, %v462
        %v464 = vpop.f32.mrf.mxu0
        %v465 = vadd.f32 0.0, %v464
        %466 = vmatmul.bf16.gmra.mxu0 %v390
        %v467 = vpop.f32.mrf.mxu0
        %v468 = vadd.f32 0.0, %v467
        %v469 = vpop.f32.mrf.mxu0
        %v470 = vadd.f32 0.0, %v469
        %471 = vmatmul.bf16.gmra.mxu0 %v393
        %v472 = vpop.f32.mrf.mxu0
        %v473 = vadd.f32 0.0, %v472
        %v474 = vpop.f32.mrf.mxu0
        %v475 = vadd.f32 0.0, %v474
        %476 = vmatmul.bf16.gmra.mxu0 %v396
        %v477 = vpop.f32.mrf.mxu0
        %v478 = vadd.f32 0.0, %v477
        %v479 = vpop.f32.mrf.mxu0
        %v480 = vadd.f32 0.0, %v479
        %481 = vmatmul.bf16.gmra.mxu0 %v399
        %v482 = vpop.f32.mrf.mxu0
        %v483 = vadd.f32 0.0, %v482
        %v484 = vpop.f32.mrf.mxu0
        %v485 = vadd.f32 0.0, %v484
        %486 = vmatmul.bf16.gmra.mxu0 %v402
        %v487 = vpop.f32.mrf.mxu0
        %v488 = vadd.f32 0.0, %v487
        %v489 = vpop.f32.mrf.mxu0
        %v490 = vadd.f32 0.0, %v489
        %491 = vmatmul.bf16.gmra.mxu0 %v405
        %v492 = vpop.f32.mrf.mxu0
        %v493 = vadd.f32 0.0, %v492
        %v494 = vpop.f32.mrf.mxu0
        %v495 = vadd.f32 0.0, %v494
        %496 = vmatmul.bf16.gmra.mxu0 %v408
        %v497 = vpop.f32.mrf.mxu0
        %v498 = vadd.f32 0.0, %v497
        %v499 = vpop.f32.mrf.mxu0
        %v500 = vadd.f32 0.0, %v499
        %501 = vmatmul.bf16.gmra.mxu0 %v411
        %v502 = vpop.f32.mrf.mxu0
        %v503 = vadd.f32 0.0, %v502
        %v504 = vpop.f32.mrf.mxu0
        %v505 = vadd.f32 0.0, %v504
        %506 = vmatmul.bf16.gmra.mxu0 %v414
        %v507 = vpop.f32.mrf.mxu0
        %v508 = vadd.f32 0.0, %v507
        %v509 = vpop.f32.mrf.mxu0
        %v510 = vadd.f32 0.0, %v509
        %511 = vdwg.mxu0
        %512 = vmatpush.bf16.msra.mxu0 0
        %513 = vmatpush.bf16.msra.mxu0 0
        %514 = vmatpush.bf16.msra.mxu0 0
        %515 = vmatpush.bf16.msra.mxu0 0
        %516 = vmatpush.bf16.msra.mxu0 0
        %517 = vmatpush.bf16.msra.mxu0 0
        %518 = vmatpush.bf16.msra.mxu0 0
        %519 = vmatpush.bf16.msra.mxu0 %v421
        %520 = vmatmul.bf16.gmra.mxu0 %v369
        %v521 = vpop.f32.mrf.mxu0
        %v522 = vadd.f32 0.0, %v521
        %v523 = vpop.f32.mrf.mxu0
        %v524 = vadd.f32 0.0, %v523
        %525 = vmatmul.bf16.gmra.mxu0 %v372
        %v526 = vpop.f32.mrf.mxu0
        %v527 = vadd.f32 0.0, %v526
        %v528 = vpop.f32.mrf.mxu0
        %v529 = vadd.f32 0.0, %v528
        %530 = vmatmul.bf16.gmra.mxu0 %v375
        %v531 = vpop.f32.mrf.mxu0
        %v532 = vadd.f32 0.0, %v531
        %v533 = vpop.f32.mrf.mxu0
        %v534 = vadd.f32 0.0, %v533
        %535 = vmatmul.bf16.gmra.mxu0 %v378
        %v536 = vpop.f32.mrf.mxu0
        %v537 = vadd.f32 0.0, %v536
        %v538 = vpop.f32.mrf.mxu0
        %v539 = vadd.f32 0.0, %v538
        %540 = vmatmul.bf16.gmra.mxu0 %v381
        %v541 = vpop.f32.mrf.mxu0
        %v542 = vadd.f32 0.0, %v541
        %v543 = vpop.f32.mrf.mxu0
        %v544 = vadd.f32 0.0, %v543
        %545 = vmatmul.bf16.gmra.mxu0 %v384
        %v546 = vpop.f32.mrf.mxu0
        %v547 = vadd.f32 0.0, %v546
        %v548 = vpop.f32.mrf.mxu0
        %v549 = vadd.f32 0.0, %v548
        %550 = vmatmul.bf16.gmra.mxu0 %v387
        %v551 = vpop.f32.mrf.mxu0
        %v552 = vadd.f32 0.0, %v551
        %v553 = vpop.f32.mrf.mxu0
        %v554 = vadd.f32 0.0, %v553
        %555 = vmatmul.bf16.gmra.mxu0 %v390
        %v556 = vpop.f32.mrf.mxu0
        %v557 = vadd.f32 0.0, %v556
        %v558 = vpop.f32.mrf.mxu0
        %v559 = vadd.f32 0.0, %v558
        %560 = vmatmul.bf16.gmra.mxu0 %v393
        %v561 = vpop.f32.mrf.mxu0
        %v562 = vadd.f32 0.0, %v561
        %v563 = vpop.f32.mrf.mxu0
        %v564 = vadd.f32 0.0, %v563
        %565 = vmatmul.bf16.gmra.mxu0 %v396
        %v566 = vpop.f32.mrf.mxu0
        %v567 = vadd.f32 0.0, %v566
        %v568 = vpop.f32.mrf.mxu0
        %v569 = vadd.f32 0.0, %v568
        %570 = vmatmul.bf16.gmra.mxu0 %v399
        %v571 = vpop.f32.mrf.mxu0
        %v572 = vadd.f32 0.0, %v571
        %v573 = vpop.f32.mrf.mxu0
        %v574 = vadd.f32 0.0, %v573
        %575 = vmatmul.bf16.gmra.mxu0 %v402
        %v576 = vpop.f32.mrf.mxu0
        %v577 = vadd.f32 0.0, %v576
        %v578 = vpop.f32.mrf.mxu0
        %v579 = vadd.f32 0.0, %v578
        %580 = vmatmul.bf16.gmra.mxu0 %v405
        %v581 = vpop.f32.mrf.mxu0
        %v582 = vadd.f32 0.0, %v581
        %v583 = vpop.f32.mrf.mxu0
        %v584 = vadd.f32 0.0, %v583
        %585 = vmatmul.bf16.gmra.mxu0 %v408
        %v586 = vpop.f32.mrf.mxu0
        %v587 = vadd.f32 0.0, %v586
        %v588 = vpop.f32.mrf.mxu0
        %v589 = vadd.f32 0.0, %v588
        %590 = vmatmul.bf16.gmra.mxu0 %v411
        %v591 = vpop.f32.mrf.mxu0
        %v592 = vadd.f32 0.0, %v591
        %v593 = vpop.f32.mrf.mxu0
        %v594 = vadd.f32 0.0, %v593
        %595 = vmatmul.bf16.gmra.mxu0 %v414
        %v596 = vpop.f32.mrf.mxu0
        %v597 = vadd.f32 0.0, %v596
        %v598 = vpop.f32.mrf.mxu0
        %v599 = vadd.f32 0.0, %v598
        %600 = vdwg.mxu0
        %v601 = vmax.f32 %v433, %v522
        %602 = vmax.xlane.f32.xlu0 %v601
        %v603 = vpop.xlane.xlu0 %602
        %v604 = vmax.f32 %v435, %v524
        %605 = vmax.xlane.f32.xlu0 %v604
        %v606 = vpop.xlane.xlu0 %605
        %v607 = vmax.f32 %v438, %v527
        %608 = vmax.xlane.f32.xlu0 %v607
        %v609 = vpop.xlane.xlu0 %608
        %v610 = vmax.f32 %v440, %v529
        %611 = vmax.xlane.f32.xlu0 %v610
        %v612 = vpop.xlane.xlu0 %611
        %v613 = vmax.f32 %v443, %v532
        %614 = vmax.xlane.f32.xlu0 %v613
        %v615 = vpop.xlane.xlu0 %614
        %v616 = vmax.f32 %v445, %v534
        %617 = vmax.xlane.f32.xlu0 %v616
        %v618 = vpop.xlane.xlu0 %617
        %v619 = vmax.f32 %v448, %v537
        %620 = vmax.xlane.f32.xlu0 %v619
        %v621 = vpop.xlane.xlu0 %620
        %v622 = vmax.f32 %v450, %v539
        %623 = vmax.xlane.f32.xlu0 %v622
        %v624 = vpop.xlane.xlu0 %623
        %v625 = vmax.f32 %v453, %v542
        %626 = vmax.xlane.f32.xlu0 %v625
        %v627 = vpop.xlane.xlu0 %626
        %v628 = vmax.f32 %v455, %v544
        %629 = vmax.xlane.f32.xlu0 %v628
        %v630 = vpop.xlane.xlu0 %629
        %v631 = vmax.f32 %v458, %v547
        %632 = vmax.xlane.f32.xlu0 %v631
        %v633 = vpop.xlane.xlu0 %632
        %v634 = vmax.f32 %v460, %v549
        %635 = vmax.xlane.f32.xlu0 %v634
        %v636 = vpop.xlane.xlu0 %635
        %v637 = vmax.f32 %v463, %v552
        %638 = vmax.xlane.f32.xlu0 %v637
        %v639 = vpop.xlane.xlu0 %638
        %v640 = vmax.f32 %v465, %v554
        %641 = vmax.xlane.f32.xlu0 %v640
        %v642 = vpop.xlane.xlu0 %641
        %v643 = vmax.f32 %v468, %v557
        %644 = vmax.xlane.f32.xlu0 %v643
        %v645 = vpop.xlane.xlu0 %644
        %v646 = vmax.f32 %v470, %v559
        %647 = vmax.xlane.f32.xlu0 %v646
        %v648 = vpop.xlane.xlu0 %647
        %v649 = vmax.f32 %v473, %v562
        %650 = vmax.xlane.f32.xlu0 %v649
        %v651 = vpop.xlane.xlu0 %650
        %v652 = vmax.f32 %v475, %v564
        %653 = vmax.xlane.f32.xlu0 %v652
        %v654 = vpop.xlane.xlu0 %653
        %v655 = vmax.f32 %v478, %v567
        %656 = vmax.xlane.f32.xlu0 %v655
        %v657 = vpop.xlane.xlu0 %656
        %v658 = vmax.f32 %v480, %v569
        %659 = vmax.xlane.f32.xlu0 %v658
        %v660 = vpop.xlane.xlu0 %659
        %v661 = vmax.f32 %v483, %v572
        %662 = vmax.xlane.f32.xlu0 %v661
        %v663 = vpop.xlane.xlu0 %662
        %v664 = vmax.f32 %v485, %v574
        %665 = vmax.xlane.f32.xlu0 %v664
        %v666 = vpop.xlane.xlu0 %665
        %v667 = vmax.f32 %v488, %v577
        %668 = vmax.xlane.f32.xlu0 %v667
        %v669 = vpop.xlane.xlu0 %668
        %v670 = vmax.f32 %v490, %v579
        %671 = vmax.xlane.f32.xlu0 %v670
        %v672 = vpop.xlane.xlu0 %671
        %v673 = vmax.f32 %v493, %v582
        %674 = vmax.xlane.f32.xlu0 %v673
        %v675 = vpop.xlane.xlu0 %674
        %v676 = vmax.f32 %v495, %v584
        %677 = vmax.xlane.f32.xlu0 %v676
        %v678 = vpop.xlane.xlu0 %677
        %v679 = vmax.f32 %v498, %v587
        %680 = vmax.xlane.f32.xlu0 %v679
        %v681 = vpop.xlane.xlu0 %680
        %v682 = vmax.f32 %v500, %v589
        %683 = vmax.xlane.f32.xlu0 %v682
        %v684 = vpop.xlane.xlu0 %683
        %v685 = vmax.f32 %v503, %v592
        %686 = vmax.xlane.f32.xlu0 %v685
        %v687 = vpop.xlane.xlu0 %686
        %v688 = vmax.f32 %v505, %v594
        %689 = vmax.xlane.f32.xlu0 %v688
        %v690 = vpop.xlane.xlu0 %689
        %v691 = vmax.f32 %v508, %v597
        %692 = vmax.xlane.f32.xlu0 %v691
        %v693 = vpop.xlane.xlu0 %692
        %v694 = vmax.f32 %v510, %v599
        %695 = vmax.xlane.f32.xlu0 %v694
        %v696 = vpop.xlane.xlu0 %695
        %v697 = vsub.f32 %v433, %v603
        %v698 = vsub.f32 %v522, %v603
        %v699 = vsub.f32 %v435, %v606
        %v700 = vsub.f32 %v524, %v606
        %v701 = vsub.f32 %v438, %v609
        %v702 = vsub.f32 %v527, %v609
        %v703 = vsub.f32 %v440, %v612
        %v704 = vsub.f32 %v529, %v612
        %v705 = vsub.f32 %v443, %v615
        %v706 = vsub.f32 %v532, %v615
        %v707 = vsub.f32 %v445, %v618
        %v708 = vsub.f32 %v534, %v618
        %v709 = vsub.f32 %v448, %v621
        %v710 = vsub.f32 %v537, %v621
        %v711 = vsub.f32 %v450, %v624
        %v712 = vsub.f32 %v539, %v624
        %v713 = vsub.f32 %v453, %v627
        %v714 = vsub.f32 %v542, %v627
        %v715 = vsub.f32 %v455, %v630
        %v716 = vsub.f32 %v544, %v630
        %v717 = vsub.f32 %v458, %v633
        %v718 = vsub.f32 %v547, %v633
        %v719 = vsub.f32 %v460, %v636
        %v720 = vsub.f32 %v549, %v636
        %v721 = vsub.f32 %v463, %v639
        %v722 = vsub.f32 %v552, %v639
        %v723 = vsub.f32 %v465, %v642
        %v724 = vsub.f32 %v554, %v642
        %v725 = vsub.f32 %v468, %v645
        %v726 = vsub.f32 %v557, %v645
        %v727 = vsub.f32 %v470, %v648
        %v728 = vsub.f32 %v559, %v648
        %v729 = vsub.f32 %v473, %v651
        %v730 = vsub.f32 %v562, %v651
        %v731 = vsub.f32 %v475, %v654
        %v732 = vsub.f32 %v564, %v654
        %v733 = vsub.f32 %v478, %v657
        %v734 = vsub.f32 %v567, %v657
        %v735 = vsub.f32 %v480, %v660
        %v736 = vsub.f32 %v569, %v660
        %v737 = vsub.f32 %v483, %v663
        %v738 = vsub.f32 %v572, %v663
        %v739 = vsub.f32 %v485, %v666
        %v740 = vsub.f32 %v574, %v666
        %v741 = vsub.f32 %v488, %v669
        %v742 = vsub.f32 %v577, %v669
        %v743 = vsub.f32 %v490, %v672
        %v744 = vsub.f32 %v579, %v672
        %v745 = vsub.f32 %v493, %v675
        %v746 = vsub.f32 %v582, %v675
        %v747 = vsub.f32 %v495, %v678
        %v748 = vsub.f32 %v584, %v678
        %v749 = vsub.f32 %v498, %v681
        %v750 = vsub.f32 %v587, %v681
        %v751 = vsub.f32 %v500, %v684
        %v752 = vsub.f32 %v589, %v684
        %v753 = vsub.f32 %v503, %v687
        %v754 = vsub.f32 %v592, %v687
        %v755 = vsub.f32 %v505, %v690
        %v756 = vsub.f32 %v594, %v690
        %v757 = vsub.f32 %v508, %v693
        %v758 = vsub.f32 %v597, %v693
        %v759 = vsub.f32 %v510, %v696
        %v760 = vsub.f32 %v599, %v696
        %v761 = vmul.f32 %v697, 1.442695
        %v762 = vpow.pop %v761
        %v763 = vmul.f32 %v698, 1.442695
        %v764 = vpow.pop %v763
        %v765 = vmul.f32 %v699, 1.442695
        %v766 = vpow.pop %v765
        %v767 = vmul.f32 %v700, 1.442695
        %v768 = vpow.pop %v767
        %v769 = vmul.f32 %v701, 1.442695
        %v770 = vpow.pop %v769
        %v771 = vmul.f32 %v702, 1.442695
        %v772 = vpow.pop %v771
        %v773 = vmul.f32 %v703, 1.442695
        %v774 = vpow.pop %v773
        %v775 = vmul.f32 %v704, 1.442695
        %v776 = vpow.pop %v775
        %v777 = vmul.f32 %v705, 1.442695
        %v778 = vpow.pop %v777
        %v779 = vmul.f32 %v706, 1.442695
        %v780 = vpow.pop %v779
        %v781 = vmul.f32 %v707, 1.442695
        %v782 = vpow.pop %v781
        %v783 = vmul.f32 %v708, 1.442695
        %v784 = vpow.pop %v783
        %v785 = vmul.f32 %v709, 1.442695
        %v786 = vpow.pop %v785
        %v787 = vmul.f32 %v710, 1.442695
        %v788 = vpow.pop %v787
        %v789 = vmul.f32 %v711, 1.442695
        %v790 = vpow.pop %v789
        %v791 = vmul.f32 %v712, 1.442695
        %v792 = vpow.pop %v791
        %v793 = vmul.f32 %v713, 1.442695
        %v794 = vpow.pop %v793
        %v795 = vmul.f32 %v714, 1.442695
        %v796 = vpow.pop %v795
        %v797 = vmul.f32 %v715, 1.442695
        %v798 = vpow.pop %v797
        %v799 = vmul.f32 %v716, 1.442695
        %v800 = vpow.pop %v799
        %v801 = vmul.f32 %v717, 1.442695
        %v802 = vpow.pop %v801
        %v803 = vmul.f32 %v718, 1.442695
        %v804 = vpow.pop %v803
        %v805 = vmul.f32 %v719, 1.442695
        %v806 = vpow.pop %v805
        %v807 = vmul.f32 %v720, 1.442695
        %v808 = vpow.pop %v807
        %v809 = vmul.f32 %v721, 1.442695
        %v810 = vpow.pop %v809
        %v811 = vmul.f32 %v722, 1.442695
        %v812 = vpow.pop %v811
        %v813 = vmul.f32 %v723, 1.442695
        %v814 = vpow.pop %v813
        %v815 = vmul.f32 %v724, 1.442695
        %v816 = vpow.pop %v815
        %v817 = vmul.f32 %v725, 1.442695
        %v818 = vpow.pop %v817
        %v819 = vmul.f32 %v726, 1.442695
        %v820 = vpow.pop %v819
        %v821 = vmul.f32 %v727, 1.442695
        %v822 = vpow.pop %v821
        %v823 = vmul.f32 %v728, 1.442695
        %v824 = vpow.pop %v823
        %v825 = vmul.f32 %v729, 1.442695
        %v826 = vpow.pop %v825
        %v827 = vmul.f32 %v730, 1.442695
        %v828 = vpow.pop %v827
        %v829 = vmul.f32 %v731, 1.442695
        %v830 = vpow.pop %v829
        %v831 = vmul.f32 %v732, 1.442695
        %v832 = vpow.pop %v831
        %v833 = vmul.f32 %v733, 1.442695
        %v834 = vpow.pop %v833
        %v835 = vmul.f32 %v734, 1.442695
        %v836 = vpow.pop %v835
        %v837 = vmul.f32 %v735, 1.442695
        %v838 = vpow.pop %v837
        %v839 = vmul.f32 %v736, 1.442695
        %v840 = vpow.pop %v839
        %v841 = vmul.f32 %v737, 1.442695
        %v842 = vpow.pop %v841
        %v843 = vmul.f32 %v738, 1.442695
        %v844 = vpow.pop %v843
        %v845 = vmul.f32 %v739, 1.442695
        %v846 = vpow.pop %v845
        %v847 = vmul.f32 %v740, 1.442695
        %v848 = vpow.pop %v847
        %v849 = vmul.f32 %v741, 1.442695
        %v850 = vpow.pop %v849
        %v851 = vmul.f32 %v742, 1.442695
        %v852 = vpow.pop %v851
        %v853 = vmul.f32 %v743, 1.442695
        %v854 = vpow.pop %v853
        %v855 = vmul.f32 %v744, 1.442695
        %v856 = vpow.pop %v855
        %v857 = vmul.f32 %v745, 1.442695
        %v858 = vpow.pop %v857
        %v859 = vmul.f32 %v746, 1.442695
        %v860 = vpow.pop %v859
        %v861 = vmul.f32 %v747, 1.442695
        %v862 = vpow.pop %v861
        %v863 = vmul.f32 %v748, 1.442695
        %v864 = vpow.pop %v863
        %v865 = vmul.f32 %v749, 1.442695
        %v866 = vpow.pop %v865
        %v867 = vmul.f32 %v750, 1.442695
        %v868 = vpow.pop %v867
        %v869 = vmul.f32 %v751, 1.442695
        %v870 = vpow.pop %v869
        %v871 = vmul.f32 %v752, 1.442695
        %v872 = vpow.pop %v871
        %v873 = vmul.f32 %v753, 1.442695
        %v874 = vpow.pop %v873
        %v875 = vmul.f32 %v754, 1.442695
        %v876 = vpow.pop %v875
        %v877 = vmul.f32 %v755, 1.442695
        %v878 = vpow.pop %v877
        %v879 = vmul.f32 %v756, 1.442695
        %v880 = vpow.pop %v879
        %v881 = vmul.f32 %v757, 1.442695
        %v882 = vpow.pop %v881
        %v883 = vmul.f32 %v758, 1.442695
        %v884 = vpow.pop %v883
        %v885 = vmul.f32 %v759, 1.442695
        %v886 = vpow.pop %v885
        %v887 = vmul.f32 %v760, 1.442695
        %v888 = vpow.pop %v887
        %v889 = vadd.f32 %v762, %v764
        %890 = vadd.xlane.f32.xlu0 %v889
        %v891 = vpop.xlane.xlu0 %890
        %v892 = vadd.f32 %v766, %v768
        %893 = vadd.xlane.f32.xlu0 %v892
        %v894 = vpop.xlane.xlu0 %893
        %v895 = vadd.f32 %v770, %v772
        %896 = vadd.xlane.f32.xlu0 %v895
        %v897 = vpop.xlane.xlu0 %896
        %v898 = vadd.f32 %v774, %v776
        %899 = vadd.xlane.f32.xlu0 %v898
        %v900 = vpop.xlane.xlu0 %899
        %v901 = vadd.f32 %v778, %v780
        %902 = vadd.xlane.f32.xlu0 %v901
        %v903 = vpop.xlane.xlu0 %902
        %v904 = vadd.f32 %v782, %v784
        %905 = vadd.xlane.f32.xlu0 %v904
        %v906 = vpop.xlane.xlu0 %905
        %v907 = vadd.f32 %v786, %v788
        %908 = vadd.xlane.f32.xlu0 %v907
        %v909 = vpop.xlane.xlu0 %908
        %v910 = vadd.f32 %v790, %v792
        %911 = vadd.xlane.f32.xlu0 %v910
        %v912 = vpop.xlane.xlu0 %911
        %v913 = vadd.f32 %v794, %v796
        %914 = vadd.xlane.f32.xlu0 %v913
        %v915 = vpop.xlane.xlu0 %914
        %v916 = vadd.f32 %v798, %v800
        %917 = vadd.xlane.f32.xlu0 %v916
        %v918 = vpop.xlane.xlu0 %917
        %v919 = vadd.f32 %v802, %v804
        %920 = vadd.xlane.f32.xlu0 %v919
        %v921 = vpop.xlane.xlu0 %920
        %v922 = vadd.f32 %v806, %v808
        %923 = vadd.xlane.f32.xlu0 %v922
        %v924 = vpop.xlane.xlu0 %923
        %v925 = vadd.f32 %v810, %v812
        %926 = vadd.xlane.f32.xlu0 %v925
        %v927 = vpop.xlane.xlu0 %926
        %v928 = vadd.f32 %v814, %v816
        %929 = vadd.xlane.f32.xlu0 %v928
        %v930 = vpop.xlane.xlu0 %929
        %v931 = vadd.f32 %v818, %v820
        %932 = vadd.xlane.f32.xlu0 %v931
        %v933 = vpop.xlane.xlu0 %932
        %v934 = vadd.f32 %v822, %v824
        %935 = vadd.xlane.f32.xlu0 %v934
        %v936 = vpop.xlane.xlu0 %935
        %v937 = vadd.f32 %v826, %v828
        %938 = vadd.xlane.f32.xlu0 %v937
        %v939 = vpop.xlane.xlu0 %938
        %v940 = vadd.f32 %v830, %v832
        %941 = vadd.xlane.f32.xlu0 %v940
        %v942 = vpop.xlane.xlu0 %941
        %v943 = vadd.f32 %v834, %v836
        %944 = vadd.xlane.f32.xlu0 %v943
        %v945 = vpop.xlane.xlu0 %944
        %v946 = vadd.f32 %v838, %v840
        %947 = vadd.xlane.f32.xlu0 %v946
        %v948 = vpop.xlane.xlu0 %947
        %v949 = vadd.f32 %v842, %v844
        %950 = vadd.xlane.f32.xlu0 %v949
        %v951 = vpop.xlane.xlu0 %950
        %v952 = vadd.f32 %v846, %v848
        %953 = vadd.xlane.f32.xlu0 %v952
        %v954 = vpop.xlane.xlu0 %953
        %v955 = vadd.f32 %v850, %v852
        %956 = vadd.xlane.f32.xlu0 %v955
        %v957 = vpop.xlane.xlu0 %956
        %v958 = vadd.f32 %v854, %v856
        %959 = vadd.xlane.f32.xlu0 %v958
        %v960 = vpop.xlane.xlu0 %959
        %v961 = vadd.f32 %v858, %v860
        %962 = vadd.xlane.f32.xlu0 %v961
        %v963 = vpop.xlane.xlu0 %962
        %v964 = vadd.f32 %v862, %v864
        %965 = vadd.xlane.f32.xlu0 %v964
        %v966 = vpop.xlane.xlu0 %965
        %v967 = vadd.f32 %v866, %v868
        %968 = vadd.xlane.f32.xlu0 %v967
        %v969 = vpop.xlane.xlu0 %968
        %v970 = vadd.f32 %v870, %v872
        %971 = vadd.xlane.f32.xlu0 %v970
        %v972 = vpop.xlane.xlu0 %971
        %v973 = vadd.f32 %v874, %v876
        %974 = vadd.xlane.f32.xlu0 %v973
        %v975 = vpop.xlane.xlu0 %974
        %v976 = vadd.f32 %v878, %v880
        %977 = vadd.xlane.f32.xlu0 %v976
        %v978 = vpop.xlane.xlu0 %977
        %v979 = vadd.f32 %v882, %v884
        %980 = vadd.xlane.f32.xlu0 %v979
        %v981 = vpop.xlane.xlu0 %980
        %v982 = vadd.f32 %v886, %v888
        %983 = vadd.xlane.f32.xlu0 %v982
        %v984 = vpop.xlane.xlu0 %983
        %v985 = vrcp.pop %v891
        %v986 = vrcp.pop %v894
        %v987 = vrcp.pop %v897
        %v988 = vrcp.pop %v900
        %v989 = vrcp.pop %v903
        %v990 = vrcp.pop %v906
        %v991 = vrcp.pop %v909
        %v992 = vrcp.pop %v912
        %v993 = vrcp.pop %v915
        %v994 = vrcp.pop %v918
        %v995 = vrcp.pop %v921
        %v996 = vrcp.pop %v924
        %v997 = vrcp.pop %v927
        %v998 = vrcp.pop %v930
        %v999 = vrcp.pop %v933
        %v1000 = vrcp.pop %v936
        %v1001 = vrcp.pop %v939
        %v1002 = vrcp.pop %v942
        %v1003 = vrcp.pop %v945
        %v1004 = vrcp.pop %v948
        %v1005 = vrcp.pop %v951
        %v1006 = vrcp.pop %v954
        %v1007 = vrcp.pop %v957
        %v1008 = vrcp.pop %v960
        %v1009 = vrcp.pop %v963
        %v1010 = vrcp.pop %v966
        %v1011 = vrcp.pop %v969
        %v1012 = vrcp.pop %v972
        %v1013 = vrcp.pop %v975
        %v1014 = vrcp.pop %v978
        %v1015 = vrcp.pop %v981
        %v1016 = vrcp.pop %v984
        %v1017 = vmul.f32 %v762, %v985
        %v1018 = vmul.f32 %v764, %v985
        %v1019 = vmul.f32 %v766, %v986
        %v1020 = vmul.f32 %v768, %v986
        %v1021 = vmul.f32 %v770, %v987
        %v1022 = vmul.f32 %v772, %v987
        %v1023 = vmul.f32 %v774, %v988
        %v1024 = vmul.f32 %v776, %v988
        %v1025 = vmul.f32 %v778, %v989
        %v1026 = vmul.f32 %v780, %v989
        %v1027 = vmul.f32 %v782, %v990
        %v1028 = vmul.f32 %v784, %v990
        %v1029 = vmul.f32 %v786, %v991
        %v1030 = vmul.f32 %v788, %v991
        %v1031 = vmul.f32 %v790, %v992
        %v1032 = vmul.f32 %v792, %v992
        %v1033 = vmul.f32 %v794, %v993
        %v1034 = vmul.f32 %v796, %v993
        %v1035 = vmul.f32 %v798, %v994
        %v1036 = vmul.f32 %v800, %v994
        %v1037 = vmul.f32 %v802, %v995
        %v1038 = vmul.f32 %v804, %v995
        %v1039 = vmul.f32 %v806, %v996
        %v1040 = vmul.f32 %v808, %v996
        %v1041 = vmul.f32 %v810, %v997
        %v1042 = vmul.f32 %v812, %v997
        %v1043 = vmul.f32 %v814, %v998
        %v1044 = vmul.f32 %v816, %v998
        %v1045 = vmul.f32 %v818, %v999
        %v1046 = vmul.f32 %v820, %v999
        %v1047 = vmul.f32 %v822, %v1000
        %v1048 = vmul.f32 %v824, %v1000
        %v1049 = vmul.f32 %v826, %v1001
        %v1050 = vmul.f32 %v828, %v1001
        %v1051 = vmul.f32 %v830, %v1002
        %v1052 = vmul.f32 %v832, %v1002
        %v1053 = vmul.f32 %v834, %v1003
        %v1054 = vmul.f32 %v836, %v1003
        %v1055 = vmul.f32 %v838, %v1004
        %v1056 = vmul.f32 %v840, %v1004
        %v1057 = vmul.f32 %v842, %v1005
        %v1058 = vmul.f32 %v844, %v1005
        %v1059 = vmul.f32 %v846, %v1006
        %v1060 = vmul.f32 %v848, %v1006
        %v1061 = vmul.f32 %v850, %v1007
        %v1062 = vmul.f32 %v852, %v1007
        %v1063 = vmul.f32 %v854, %v1008
        %v1064 = vmul.f32 %v856, %v1008
        %v1065 = vmul.f32 %v858, %v1009
        %v1066 = vmul.f32 %v860, %v1009
        %v1067 = vmul.f32 %v862, %v1010
        %v1068 = vmul.f32 %v864, %v1010
        %v1069 = vmul.f32 %v866, %v1011
        %v1070 = vmul.f32 %v868, %v1011
        %v1071 = vmul.f32 %v870, %v1012
        %v1072 = vmul.f32 %v872, %v1012
        %v1073 = vmul.f32 %v874, %v1013
        %v1074 = vmul.f32 %v876, %v1013
        %v1075 = vmul.f32 %v878, %v1014
        %v1076 = vmul.f32 %v880, %v1014
        %v1077 = vmul.f32 %v882, %v1015
        %v1078 = vmul.f32 %v884, %v1015
        %v1079 = vmul.f32 %v886, %v1016
        %v1080 = vmul.f32 %v888, %v1016
        %v1081 = vpack.c.bf16 %v1019, %v1017
        %v1082 = vpack.c.bf16 %v1020, %v1018
        %v1083 = vpack.c.bf16 %v1023, %v1021
        %v1084 = vpack.c.bf16 %v1024, %v1022
        %v1085 = vpack.c.bf16 %v1027, %v1025
        %v1086 = vpack.c.bf16 %v1028, %v1026
        %v1087 = vpack.c.bf16 %v1031, %v1029
        %v1088 = vpack.c.bf16 %v1032, %v1030
        %v1089 = vpack.c.bf16 %v1035, %v1033
        %v1090 = vpack.c.bf16 %v1036, %v1034
        %v1091 = vpack.c.bf16 %v1039, %v1037
        %v1092 = vpack.c.bf16 %v1040, %v1038
        %v1093 = vpack.c.bf16 %v1043, %v1041
        %v1094 = vpack.c.bf16 %v1044, %v1042
        %v1095 = vpack.c.bf16 %v1047, %v1045
        %v1096 = vpack.c.bf16 %v1048, %v1046
        %v1097 = vpack.c.bf16 %v1051, %v1049
        %v1098 = vpack.c.bf16 %v1052, %v1050
        %v1099 = vpack.c.bf16 %v1055, %v1053
        %v1100 = vpack.c.bf16 %v1056, %v1054
        %v1101 = vpack.c.bf16 %v1059, %v1057
        %v1102 = vpack.c.bf16 %v1060, %v1058
        %v1103 = vpack.c.bf16 %v1063, %v1061
        %v1104 = vpack.c.bf16 %v1064, %v1062
        %v1105 = vpack.c.bf16 %v1067, %v1065
        %v1106 = vpack.c.bf16 %v1068, %v1066
        %v1107 = vpack.c.bf16 %v1071, %v1069
        %v1108 = vpack.c.bf16 %v1072, %v1070
        %v1109 = vpack.c.bf16 %v1075, %v1073
        %v1110 = vpack.c.bf16 %v1076, %v1074
        %v1111 = vpack.c.bf16 %v1079, %v1077
        %v1112 = vpack.c.bf16 %v1080, %v1078
        %1113 = vmatpush.bf16.msra.mxu0 %v1095
        %1114 = vmatpush.bf16.msra.mxu0 %v1093
        %1115 = vmatpush.bf16.msra.mxu0 %v1091
        %1116 = vmatpush.bf16.msra.mxu0 %v1089
        %1117 = vmatpush.bf16.msra.mxu0 %v1087
        %1118 = vmatpush.bf16.msra.mxu0 %v1085
        %1119 = vmatpush.bf16.msra.mxu0 %v1083
        %1120 = vmatpush.bf16.msra.mxu0 %v1081
        %1121 = vmatmul.bf16.gmra.mxu0 %v341
        %v1122 = vpop.f32.mrf.mxu0
        %v1123 = vadd.f32 0.0, %v1122
        %v1124 = vpop.f32.mrf.mxu0
        %v1125 = vadd.f32 0.0, %v1124
        %1126 = vdwg.mxu0
        %1127 = vmatpush.bf16.msra.mxu0 %v1111
        %1128 = vmatpush.bf16.msra.mxu0 %v1109
        %1129 = vmatpush.bf16.msra.mxu0 %v1107
        %1130 = vmatpush.bf16.msra.mxu0 %v1105
        %1131 = vmatpush.bf16.msra.mxu0 %v1103
        %1132 = vmatpush.bf16.msra.mxu0 %v1101
        %1133 = vmatpush.bf16.msra.mxu0 %v1099
        %1134 = vmatpush.bf16.msra.mxu0 %v1097
        %1135 = vmatmul.bf16.gmra.mxu0 %v342
        %v1136 = vpop.f32.mrf.mxu0
        %v1137 = vadd.f32 %v1123, %v1136
        %v1138 = vpop.f32.mrf.mxu0
        %v1139 = vadd.f32 %v1125, %v1138
        %1140 = vdwg.mxu0
        %1141 = vmatpush.bf16.msra.mxu0 %v1096
        %1142 = vmatpush.bf16.msra.mxu0 %v1094
        %1143 = vmatpush.bf16.msra.mxu0 %v1092
        %1144 = vmatpush.bf16.msra.mxu0 %v1090
        %1145 = vmatpush.bf16.msra.mxu0 %v1088
        %1146 = vmatpush.bf16.msra.mxu0 %v1086
        %1147 = vmatpush.bf16.msra.mxu0 %v1084
        %1148 = vmatpush.bf16.msra.mxu0 %v1082
        %1149 = vmatmul.bf16.gmra.mxu0 %v341
        %v1150 = vpop.f32.mrf.mxu0
        %v1151 = vadd.f32 0.0, %v1150
        %v1152 = vpop.f32.mrf.mxu0
        %v1153 = vadd.f32 0.0, %v1152
        %1154 = vdwg.mxu0
        %1155 = vmatpush.bf16.msra.mxu0 %v1112
        %1156 = vmatpush.bf16.msra.mxu0 %v1110
        %1157 = vmatpush.bf16.msra.mxu0 %v1108
        %1158 = vmatpush.bf16.msra.mxu0 %v1106
        %1159 = vmatpush.bf16.msra.mxu0 %v1104
        %1160 = vmatpush.bf16.msra.mxu0 %v1102
        %1161 = vmatpush.bf16.msra.mxu0 %v1100
        %1162 = vmatpush.bf16.msra.mxu0 %v1098
        %1163 = vmatmul.bf16.gmra.mxu0 %v342
        %v1164 = vpop.f32.mrf.mxu0
        %v1165 = vadd.f32 %v1151, %v1164
        %v1166 = vpop.f32.mrf.mxu0
        %v1167 = vadd.f32 %v1153, %v1166
        %1168 = vdwg.mxu0
        %s1169 = sld [smem:[#allocation2]]
        %v1170 = vstv %s1169
        %v1171 = vmul.f32 %v1170, %v1137
        %v1172 = vmul.f32 %v1170, %v1165
        %v1173 = vmul.f32 %v1170, %v1139
        %v1174 = vmul.f32 %v1170, %v1167
        %v1175 = vadd.f32 %v1171, %v309
        %v1176 = vadd.f32 %v1172, %v333
        %v1177 = vadd.f32 %v1173, %v311
        %v1178 = vadd.f32 %v1174, %v335
        %1179 = vst [vmem:[%s191] sm:$0xff] %v1175
        %1180 = vst [vmem:[%s191 + $0x8] sm:$0xff] %v1176
        %1181 = vst [vmem:[%s191 + $0x10] sm:$0xff] %v1177
        %1182 = vst [vmem:[%s191 + $0x18] sm:$0xff] %v1178
        %s1183 = sand.u32 %s116, 1
        %s1184 = scalar_lea.sflag [#allocation4], %s1183
        %s1185 = sand.u32 %s116, 1
        %s1186 = smul.addr %s1185, 32
        %s1187 = scalar_lea.vmem [#allocation3], %s1186
        // Predicated region
        $region37: #{tpu_custom_call.1} parent=35 // pred_check
          %p1188 = pneg %p126
        $region38: #{tpu_custom_call.1} parent=35 // pred_check_branch
          %1190 = sbr.rel (%p1188) target = $region40
        $region39: #{tpu_custom_call.1} parent=35 // pred_region
          %1192 = vsyncadd %s1184, 0
          %s1193 = smul.addr %s19, 4
          %s1194 = smul.addr %s1193, 8
          %s1195 = scalar_lea.hbm %s4, %s1194
          %s1196 = sshll.u32 %s1187, 4
          %s1197 = int_to_ptr.vmem [resolvable:$true] %s1196
          %s1198 = sshll.u32 %s1195, 4
          %s1199 = int_to_ptr.hbm [resolvable:$true] %s1198
          %1204 = dma.vmem_to_hbm [thread:$0]  %s1197, 512, %s1199, %s1184, 256, 256, 16
        $region40: #{tpu_custom_call.1} parent=35 // pred_fallthru
          _
      $region36: #{tpu_custom_call.1} parent=5 // pred_fallthru
        _
      %p1205 = scmp.le.s32.totalorder 2, %s14
      // Predicated region
      $region41: #{tpu_custom_call.1} parent=5 // pred_check
        %p1206 = pneg %p1205
      $region42: #{tpu_custom_call.1} parent=5 // pred_check_branch
        %1208 = sbr.rel (%p1206) target = $region44
      $region43: #{tpu_custom_call.1} parent=5 // pred_region
        %s1209 = ssub.s32 %s14, 2
        // Predicated region
        $region45: #{tpu_custom_call.1} parent=43 // pred_check
          %p1210 = pneg %p132
        $region46: #{tpu_custom_call.1} parent=43 // pred_check_branch
          %1212 = sbr.rel (%p1210) target = $region48
        $region47: #{tpu_custom_call.1} parent=43 // pred_region
          %s1213 = sand.u32 %s117, 1
          %s1214 = scalar_lea.sflag [#allocation4], %s1213
          %s1215 = sand.u32 %s117, 1
          %s1216 = smul.addr %s1215, 32
          %s1217 = scalar_lea.vmem [#allocation3], %s1216
          %1219 = dma.done %s1214, 512
        $region48: #{tpu_custom_call.1} parent=43 // pred_fallthru
          _
      $region44: #{tpu_custom_call.1} parent=5 // pred_fallthru
        _
    $region6: #{tpu_custom_call.1} parent=1 // loop_footer
      %s18 = sadd.s32 1, %s14
    $region7: #{tpu_custom_call.1} parent=1 // loop_footer_branch
      %13 = sbr.rel target = $region3
    $region8: #{tpu_custom_call.1} parent=1 // loop_exit
      _
    %1220 = vsyncpa [#allocation4], 1
    %s1221 = scalar_lea.sflag [#allocation4], 1
    %1222 = vsyncpa %s1221, 1

</llo_original>
